<compile_context>
chip_gen: v7x
topology: tpu7x:2x2x1
jax: 0.10.0
libtpu: 0.0.40
codegen_flags: <defaults>
</compile_context>

<pallas_src>
import functools

import jax
import jax.numpy as jnp
from jax.experimental import pallas as pl
from jax.experimental.pallas import tpu as pltpu


def _round_up(n, m):
    return ((n + m - 1) // m) * m


# ----------------------------- Pallas kernel --------------------------------

def _fused_gcnn_kernel(s_ref, p_ref, x_ref, out_ref, *,
                       layer_layout, fc_layout, slope, out_dim, fc_out):
    """Fused forward for one graph: all GCN layers + FC head.

    s_ref   : (N, N)        normalized shift operator (resident across grid)
    p_ref   : (R, C)        packed parameter slab      (resident across grid)
    x_ref   : (N, in_dim)   node features for this grid step's graph
    out_ref : (N, PADW)     lane-dense output slab:
                            [:, :out_dim]                        importance_pre_fc
                            [:, out_dim:out_dim+fc_out]          pre_sigmoid
                            [:, out_dim+fc_out:out_dim+2*fc_out] sigmoid output
                            remaining lanes zero padding
    layer_layout: tuple of (row_W, in_dim, out_dim, row_b) static offsets
    fc_layout   : (row_fcWt, fc_in, fc_out, row_fcb) static offsets
    """
    S = s_ref[...]
    P = p_ref[...]          # single whole-slab load; static slices below
    x = x_ref[...]

    n_layers = len(layer_layout)
    for i, (rw, fin, fout, rb) in enumerate(layer_layout):
        W = P[rw:rw + fin, :fout]
        b = P[rb:rb + 1, :fout]
        if fin <= fout:
            # NxN S-matmul at the (narrower) input width
            z = jnp.dot(S, x, preferred_element_type=jnp.float32)
            z = jnp.dot(z, W, preferred_element_type=jnp.float32)
        else:
            # shrink the feature width first, then apply S
            z = jnp.dot(x, W, preferred_element_type=jnp.float32)
            z = jnp.dot(S, z, preferred_element_type=jnp.float32)
        z = z + b                                   # bias broadcast over nodes
        if i < n_layers - 1:
            z = jnp.where(z >= 0, z, slope * z)     # LeakyReLU (VPU slot, free)
            # TODO(synk): F.dropout with p>0 in training mode is not
            #             implemented (eval / p=0 semantics -> identity).
        x = z

    # classifier Linear (weight pre-transposed in the slab) + sigmoid
    rfw, fc_in, fco, rfb = fc_layout
    Wfc = P[rfw:rfw + fc_in, :fco]
    bfc = P[rfb:rfb + 1, :fco]
    y = jnp.dot(x, Wfc, preferred_element_type=jnp.float32) + bfc
    sig = jax.nn.sigmoid(y)                         # exp on EUP slot, free

    n_rows = x.shape[0]
    used = out_dim + 2 * fc_out
    pad_cols = out_ref.shape[-1] - used
    # single lane-dense unmasked store of everything
    out_ref[...] = jnp.concatenate(
        [x, y, sig, jnp.zeros((n_rows, pad_cols), jnp.float32)], axis=-1)


# ----------------------------- forward wrapper -------------------------------

def standard_gcnn_forward(x, params, *, layer_layout, fc_layout, slope=0.01):
    """Fused forward.  x: (N, in_dim) single graph or (B, N, in_dim) batch
    of graphs sharing the same normalized shift operator."""
    squeeze = (x.ndim == 2)
    if squeeze:
        x = x[None]
    B, N, in_dim = x.shape

    S = params["S"]
    slab = params["param_slab"]
    out_dim = layer_layout[-1][2]
    fc_out = fc_layout[2]
    used = out_dim + 2 * fc_out
    padw = max(128, _round_up(used, 128))

    kernel = functools.partial(
        _fused_gcnn_kernel,
        layer_layout=layer_layout, fc_layout=fc_layout,
        slope=slope, out_dim=out_dim, fc_out=fc_out)

    out_slab = pl.pallas_call(
        kernel,
        out_shape=jax.ShapeDtypeStruct((B, N, padw), jnp.float32),
        grid=(B,),
        in_specs=[
            pl.BlockSpec(S.shape, lambda b: (0, 0)),          # S resident
            pl.BlockSpec(slab.shape, lambda b: (0, 0)),       # params resident
            pl.BlockSpec((None, N, in_dim), lambda b: (b, 0, 0)),
        ],
        out_specs=pl.BlockSpec((None, N, padw), lambda b: (b, 0, 0)),
        compiler_params=pltpu.CompilerParams(
            dimension_semantics=("parallel",)),               # 2 TCs on v7x
    )(S, slab, x)

    importance_pre_fc = out_slab[:, :, :out_dim]
    pre_sigmoid = out_slab[:, :, out_dim:out_dim + fc_out]
    output = out_slab[:, :, out_dim + fc_out:used]
    if squeeze:
        importance_pre_fc = importance_pre_fc[0]
        pre_sigmoid = pre_sigmoid[0]
        output = output[0]

    # returned exactly like the torch module:
    # (output, importance_pre_fc, classifier[0].weight, pre_sigmoid, convs[0].W)
    return output, importance_pre_fc, params["fc_W"], pre_sigmoid, params["W_first"]


# ----------------------------- parameter setup (plain JAX glue) --------------

def normalize_shift_operator(S):
    # S <- S + I ; D_inv = diag(1/sqrt(rowsum)) ; S <- D_inv @ S @ D_inv
    S = S + jnp.eye(S.shape[0], dtype=S.dtype)
    d = S.sum(axis=1)
    d_inv_sqrt = 1.0 / jnp.sqrt(d)
    return S * d_inv_sqrt[:, None] * d_inv_sqrt[None, :]


def init_gcn_layer_params(key, in_dim, out_dim):
    kW, kb = jax.random.split(key)
    # kaiming_uniform_ on W (in_dim, out_dim): fan_in = W.size(1) = out_dim,
    # gain = sqrt(2) (leaky_relu, a=0) -> bound = sqrt(6 / fan_in)
    bound_w = jnp.sqrt(6.0 / out_dim)
    W = jax.random.uniform(kW, (in_dim, out_dim), jnp.float32, -bound_w, bound_w)
    std = 1.0 / (in_dim * out_dim)
    b = jax.random.uniform(kb, (out_dim,), jnp.float32, -std, std)
    return W, b


def init_fc_params(key, fc_in, fc_out):
    kW, kb = jax.random.split(key)
    # torch Linear default init: U(-1/sqrt(fan_in), 1/sqrt(fan_in))
    bound = 1.0 / jnp.sqrt(fc_in)
    W = jax.random.uniform(kW, (fc_out, fc_in), jnp.float32, -bound, bound)
    b = jax.random.uniform(kb, (fc_out,), jnp.float32, -bound, bound)
    return W, b


def prepare_params(S_norm, conv_params, fc_W, fc_b):
    """One-time hoisting: pack every parameter into a single contiguous f32
    slab (row offsets 8-aligned so in-kernel static slices stay tile-aligned),
    pre-transpose the fc weight, reshape biases to rows."""
    Ws = [W for (W, _) in conv_params]
    bs = [b for (_, b) in conv_params]
    fc_Wt = fc_W.T                                   # (fc_in, fc_out)
    width = int(max([int(W.shape[1]) for W in Ws] + [int(fc_Wt.shape[1])]))

    blocks = []
    row = 0

    def _add(arr2d):
        nonlocal row
        r0 = row
        blocks.append((r0, arr2d))
        row = _round_up(r0 + int(arr2d.shape[0]), 8)
        return r0

    layer_layout = []
    for W, b in zip(Ws, bs):
        rw = _add(W)
        rb = _add(b.reshape(1, -1))
        layer_layout.append((rw, int(W.shape[0]), int(W.shape[1]), rb))
    rfw = _add(fc_Wt)
    rfb = _add(fc_b.reshape(1, -1))
    fc_layout = (rfw, int(fc_Wt.shape[0]), int(fc_Wt.shape[1]), rfb)

    total_rows = _round_up(row, 8)
    slab = jnp.zeros((total_rows, width), jnp.float32)
    for r0, arr in blocks:
        slab = slab.at[r0:r0 + arr.shape[0], :arr.shape[1]].set(
            arr.astype(jnp.float32))

    arrays = {
        "S": S_norm.astype(jnp.float32),
        "param_slab": slab,
        "fc_W": fc_W,        # original layout, returned as-is
        "W_first": Ws[0],    # convs[0].W, returned as-is
    }
    return arrays, tuple(layer_layout), fc_layout


# ----------------------------- pure-JAX reference ----------------------------

def _reference_forward_single(x, S, conv_params, fc_W, fc_b, slope=0.01):
    h = x
    for i, (W, b) in enumerate(conv_params):
        z = S @ h @ W + b[None, :]
        if i < len(conv_params) - 1:
            z = jnp.where(z >= 0, z, slope * z)
        h = z
    imp = h
    pre = h @ fc_W.T + fc_b[None, :]
    return jax.nn.sigmoid(pre), imp, pre


# ----------------------------- main -----------------------------------------

if __name__ == "__main__":
    # small shapes consistent with the module
    N_NODES = 16       # graph size (rows of S and x)
    IN_DIM = 8
    HID_DIM = 32
    OUT_DIM = 8
    FC_LAYER = [(OUT_DIM, 4)]   # fc_layer[0] = (fc_in, fc_out)
    N_LAYERS = 3
    BATCH = 2                   # graphs per call (shared S), grid axis

    key = jax.random.PRNGKey(0)
    k_adj, k_x, k_p = jax.random.split(key, 3)

    # deterministic symmetric binary adjacency (no self-loops; normalization adds I)
    A = (jax.random.uniform(k_adj, (N_NODES, N_NODES)) < 0.3).astype(jnp.float32)
    A = jnp.triu(A, k=1)
    S = A + A.T
    S_norm = normalize_shift_operator(S)

    # GCN layer params: in->hid, hid->hid, hid->out
    dims = [(IN_DIM, HID_DIM)] + [(HID_DIM, HID_DIM)] * (N_LAYERS - 2) + [(HID_DIM, OUT_DIM)]
    conv_params = []
    pkeys = jax.random.split(k_p, N_LAYERS + 1)
    for (di, do), pk in zip(dims, pkeys[:N_LAYERS]):
        conv_params.append(init_gcn_layer_params(pk, di, do))
    fc_W, fc_b = init_fc_params(pkeys[-1], FC_LAYER[0][0], FC_LAYER[0][1])

    arrays, layer_layout, fc_layout = prepare_params(S_norm, conv_params, fc_W, fc_b)

    # batched input node features (graphs sharing the same S)
    xb = jax.random.normal(k_x, (BATCH, N_NODES, IN_DIM), dtype=jnp.float32)

    # layouts are static Python metadata -> closed over, not traced
    fwd = jax.jit(functools.partial(standard_gcnn_forward,
                                    layer_layout=layer_layout,
                                    fc_layout=fc_layout))

    out = jax.block_until_ready(fwd(xb, arrays))
    output, importance_pre_fc, first_layer_weights, pre_sigmoid, first_gcn_W = out

    assert output.shape == (BATCH, N_NODES, FC_LAYER[0][1])
    assert importance_pre_fc.shape == (BATCH, N_NODES, OUT_DIM)
    assert pre_sigmoid.shape == (BATCH, N_NODES, FC_LAYER[0][1])
    assert first_layer_weights.shape == (FC_LAYER[0][1], FC_LAYER[0][0])
    assert first_gcn_W.shape == (IN_DIM, HID_DIM)

    # correctness vs pure-JAX reference
    ref_sig, ref_imp, ref_pre = jax.vmap(
        lambda xi: _reference_forward_single(xi, S_norm, conv_params, fc_W, fc_b))(xb)
    assert bool(jnp.allclose(output, ref_sig, rtol=1e-4, atol=1e-4))
    assert bool(jnp.allclose(importance_pre_fc, ref_imp, rtol=1e-4, atol=1e-4))
    assert bool(jnp.allclose(pre_sigmoid, ref_pre, rtol=1e-4, atol=1e-4))

    # single-graph (module-shaped) path: (N, in_dim) in, (N, fc_out) out
    out1 = jax.block_until_ready(fwd(xb[0], arrays))
    assert out1[0].shape == (N_NODES, FC_LAYER[0][1])
    assert bool(jnp.allclose(out1[0], ref_sig[0], rtol=1e-4, atol=1e-4))

    assert bool(jnp.all(jnp.isfinite(output)))
    assert bool(jnp.all(jnp.isfinite(pre_sigmoid)))

    print("KERNEL_OK")
</pallas_src>

<mosaic_0001>
module attributes {stable_mosaic.version = 11 : i64} {
  func.func @_fused_gcnn_kernel(%arg0: i32, %arg1: memref<16x16xf32, #tpu.memory_space<vmem>>, %arg2: memref<112x32xf32, #tpu.memory_space<vmem>>, %arg3: memref<1x16x8xf32, #tpu.memory_space<vmem>>, %arg4: memref<1x16x128xf32, #tpu.memory_space<vmem>>) attributes {dimension_semantics = [#tpu.dimension_semantics<parallel>], iteration_bounds = array<i64: 2>, scalar_prefetch = 0 : i64, scratch_operands = 0 : i64, tpu.core_type = #tpu.core_type<tc>, window_params = [{pipeline_mode = #tpu.pipeline_mode<synchronous>, transform_indices = @transform_0, window_bounds = array<i64: 16, 16>}, {pipeline_mode = #tpu.pipeline_mode<synchronous>, transform_indices = @transform_1, window_bounds = array<i64: 112, 32>}, {transform_indices = @transform_2, window_bounds = array<i64: 1, 16, 8>}, {transform_indices = @transform_3, window_bounds = array<i64: 1, 16, 128>}]} {
    %c0 = arith.constant 0 : index
    %c0_0 = arith.constant 0 : index
    %0 = vector.load %arg1[%c0, %c0_0] : memref<16x16xf32, #tpu.memory_space<vmem>>, vector<16x16xf32>
    %c0_1 = arith.constant 0 : index
    %c0_2 = arith.constant 0 : index
    %1 = vector.load %arg2[%c0_1, %c0_2] : memref<112x32xf32, #tpu.memory_space<vmem>>, vector<112x32xf32>
    %c0_3 = arith.constant 0 : index
    %c0_4 = arith.constant 0 : index
    %c0_5 = arith.constant 0 : index
    %2 = vector.load %arg3[%c0_3, %c0_4, %c0_5] : memref<1x16x8xf32, #tpu.memory_space<vmem>>, vector<1x16x8xf32>
    %3 = vector.shape_cast %2 : vector<1x16x8xf32> to vector<16x8xf32>
    %4 = vector.extract_strided_slice %1 {offsets = [0, 0], sizes = [8, 32], strides = [1, 1]} : vector<112x32xf32> to vector<8x32xf32>
    %5 = vector.extract_strided_slice %1 {offsets = [8, 0], sizes = [1, 32], strides = [1, 1]} : vector<112x32xf32> to vector<1x32xf32>
    %cst = arith.constant dense<0.000000e+00> : vector<16x8xf32>
    %6 = tpu.matmul %0, %3, %cst {dimension_numbers = #tpu.dot_dimension_numbers<[1], [0], [0], [1], [0, 0, 1, 1], [], []>} : vector<16x16xf32>, vector<16x8xf32>, vector<16x8xf32> -> vector<16x8xf32>
    %cst_6 = arith.constant dense<0.000000e+00> : vector<16x32xf32>
    %7 = tpu.matmul %6, %4, %cst_6 {dimension_numbers = #tpu.dot_dimension_numbers<[1], [0], [0], [1], [0, 0, 1, 1], [], []>} : vector<16x8xf32>, vector<8x32xf32>, vector<16x32xf32> -> vector<16x32xf32>
    %8 = vector.broadcast %5 : vector<1x32xf32> to vector<16x32xf32>
    %9 = arith.addf %7, %8 : vector<16x32xf32>
    %cst_7 = arith.constant 0.000000e+00 : f32
    %10 = vector.broadcast %cst_7 : f32 to vector<16x32xf32>
    %11 = arith.cmpf oge, %9, %10 : vector<16x32xf32>
    %cst_8 = arith.constant 0.00999999977 : f32
    %12 = vector.broadcast %cst_8 : f32 to vector<16x32xf32>
    %13 = arith.mulf %12, %9 : vector<16x32xf32>
    %14 = arith.select %11, %9, %13 : vector<16x32xi1>, vector<16x32xf32>
    %15 = vector.extract_strided_slice %1 {offsets = [16, 0], sizes = [32, 32], strides = [1, 1]} : vector<112x32xf32> to vector<32x32xf32>
    %16 = vector.extract_strided_slice %1 {offsets = [48, 0], sizes = [1, 32], strides = [1, 1]} : vector<112x32xf32> to vector<1x32xf32>
    %cst_9 = arith.constant dense<0.000000e+00> : vector<16x32xf32>
    %17 = tpu.matmul %0, %14, %cst_9 {dimension_numbers = #tpu.dot_dimension_numbers<[1], [0], [0], [1], [0, 0, 1, 1], [], []>} : vector<16x16xf32>, vector<16x32xf32>, vector<16x32xf32> -> vector<16x32xf32>
    %cst_10 = arith.constant dense<0.000000e+00> : vector<16x32xf32>
    %18 = tpu.matmul %17, %15, %cst_10 {dimension_numbers = #tpu.dot_dimension_numbers<[1], [0], [0], [1], [0, 0, 1, 1], [], []>} : vector<16x32xf32>, vector<32x32xf32>, vector<16x32xf32> -> vector<16x32xf32>
    %19 = vector.broadcast %16 : vector<1x32xf32> to vector<16x32xf32>
    %20 = arith.addf %18, %19 : vector<16x32xf32>
    %cst_11 = arith.constant 0.000000e+00 : f32
    %21 = vector.broadcast %cst_11 : f32 to vector<16x32xf32>
    %22 = arith.cmpf oge, %20, %21 : vector<16x32xf32>
    %cst_12 = arith.constant 0.00999999977 : f32
    %23 = vector.broadcast %cst_12 : f32 to vector<16x32xf32>
    %24 = arith.mulf %23, %20 : vector<16x32xf32>
    %25 = arith.select %22, %20, %24 : vector<16x32xi1>, vector<16x32xf32>
    %26 = vector.extract_strided_slice %1 {offsets = [56, 0], sizes = [32, 8], strides = [1, 1]} : vector<112x32xf32> to vector<32x8xf32>
    %27 = vector.extract_strided_slice %1 {offsets = [88, 0], sizes = [1, 8], strides = [1, 1]} : vector<112x32xf32> to vector<1x8xf32>
    %cst_13 = arith.constant dense<0.000000e+00> : vector<16x8xf32>
    %28 = tpu.matmul %25, %26, %cst_13 {dimension_numbers = #tpu.dot_dimension_numbers<[1], [0], [0], [1], [0, 0, 1, 1], [], []>} : vector<16x32xf32>, vector<32x8xf32>, vector<16x8xf32> -> vector<16x8xf32>
    %cst_14 = arith.constant dense<0.000000e+00> : vector<16x8xf32>
    %29 = tpu.matmul %0, %28, %cst_14 {dimension_numbers = #tpu.dot_dimension_numbers<[1], [0], [0], [1], [0, 0, 1, 1], [], []>} : vector<16x16xf32>, vector<16x8xf32>, vector<16x8xf32> -> vector<16x8xf32>
    %30 = vector.broadcast %27 : vector<1x8xf32> to vector<16x8xf32>
    %31 = arith.addf %29, %30 : vector<16x8xf32>
    %32 = vector.extract_strided_slice %1 {offsets = [96, 0], sizes = [8, 4], strides = [1, 1]} : vector<112x32xf32> to vector<8x4xf32>
    %33 = vector.extract_strided_slice %1 {offsets = [104, 0], sizes = [1, 4], strides = [1, 1]} : vector<112x32xf32> to vector<1x4xf32>
    %cst_15 = arith.constant dense<0.000000e+00> : vector<16x4xf32>
    %34 = tpu.matmul %31, %32, %cst_15 {dimension_numbers = #tpu.dot_dimension_numbers<[1], [0], [0], [1], [0, 0, 1, 1], [], []>} : vector<16x8xf32>, vector<8x4xf32>, vector<16x4xf32> -> vector<16x4xf32>
    %35 = vector.broadcast %33 : vector<1x4xf32> to vector<16x4xf32>
    %36 = arith.addf %34, %35 : vector<16x4xf32>
    %37 = arith.negf %36 : vector<16x4xf32>
    %38 = math.exp %37 : vector<16x4xf32>
    %cst_16 = arith.constant 1.000000e+00 : f32
    %39 = vector.broadcast %cst_16 : f32 to vector<16x4xf32>
    %40 = arith.addf %39, %38 : vector<16x4xf32>
    %41 = arith.divf %39, %40 : vector<16x4xf32>
    %cst_17 = arith.constant 0.000000e+00 : f32
    %42 = vector.broadcast %cst_17 : f32 to vector<16x112xf32>
    %43 = tpu.concatenate %31, %36, %41, %42 in 1 : vector<16x8xf32>, vector<16x4xf32>, vector<16x4xf32>, vector<16x112xf32> -> vector<16x128xf32>
    %c0_18 = arith.constant 0 : index
    %c0_19 = arith.constant 0 : index
    %c0_20 = arith.constant 0 : index
    %44 = vector.load %arg4[%c0_18, %c0_19, %c0_20] : memref<1x16x128xf32, #tpu.memory_space<vmem>>, vector<1x16x128xf32>
    %45 = vector.shape_cast %44 : vector<1x16x128xf32> to vector<16x128xf32>
    %46 = vector.shape_cast %43 : vector<16x128xf32> to vector<1x16x128xf32>
    tpu.vector_store %arg4[%c0_18, %c0_19, %c0_20], %46 {strides = array<i32>} : memref<1x16x128xf32, #tpu.memory_space<vmem>>, vector<1x16x128xf32>,
    return
  }
  func.func @transform_0(%arg0: i32) -> (i32, i32) {
    %c0_i32 = arith.constant 0 : i32
    %c0_i32_0 = arith.constant 0 : i32
    %c0_i32_1 = arith.constant 0 : i32
    return %c0_i32, %c0_i32_0 : i32, i32
  }
  func.func @transform_1(%arg0: i32) -> (i32, i32) {
    %c0_i32 = arith.constant 0 : i32
    %c0_i32_0 = arith.constant 0 : i32
    %c0_i32_1 = arith.constant 0 : i32
    return %c0_i32, %c0_i32_0 : i32, i32
  }
  func.func @transform_2(%arg0: i32) -> (i32, i32, i32) {
    %c0_i32 = arith.constant 0 : i32
    %c0_i32_0 = arith.constant 0 : i32
    %c0_i32_1 = arith.constant 0 : i32
    return %arg0, %c0_i32, %c0_i32_0 : i32, i32, i32
  }
  func.func @transform_3(%arg0: i32) -> (i32, i32, i32) {
    %c0_i32 = arith.constant 0 : i32
    %c0_i32_0 = arith.constant 0 : i32
    %c0_i32_1 = arith.constant 0 : i32
    return %arg0, %c0_i32, %c0_i32_0 : i32, i32, i32
  }
}

</mosaic_0001>

<llo_original>
// kernel: standard_gcnn_forward.1
$region0: #{standard_gcnn_forward.1}
  #allocation0 [shape = 'u32[]', space=smem, size = 0x4, offset = 0x4, fixed_abs, tag = 'smem constant byte address 0x4 - core index']
  #allocation1 [shape = 'u32[144,128]{1,0:T(1,128)}', space=vmem, size = 0x12000, scoped, tag = 'internal scratch']
  %s0 = inlined_call_operand.vmem [shape: f32[16,16], index: 0, kind: input, shape index: {}]
  %s1 = inlined_call_operand.vmem [shape: f32[112,32], index: 1, kind: input, shape index: {}]
  %s2 = inlined_call_operand.vmem [shape: f32[2,16,8], index: 2, kind: input, shape index: {}]
  %s3 = inlined_call_operand.vmem [shape: f32[2,16,128], index: 3, kind: output, shape index: {}]
  %s4 = sld [smem:[#allocation0]]
  $region45: #{standard_gcnn_forward.1} parent=0
    _
  %s6 = ssub.s32 1, %s4
  %s7 = scalar_select 0, %s6, %s4
  loop: start=0, step=1, limit=4
  $region2: #{standard_gcnn_forward.1} parent=0 // loop_pre_header
    _
  $region3: #{standard_gcnn_forward.1} parent=0 // loop_header
    %s9 = sphi 0, %s13
    %p10 = scmp.ge.s32.totalorder %s9, 4
    %s17 = sphi 0, %s17
    %s19 = sphi 0, %s17
    %s20 = sphi 0, %s19
    %s34 = sphi 0, %s20
    %s38 = sphi 0, %s38
    %s40 = sphi 0, %s38
    %s41 = sphi 0, %s40
    %s55 = sphi 0, %s41
    %s61 = sphi 0, %s63
    %s64 = sphi 0, %s61
    %s65 = sphi 0, %s64
    %s81 = sphi 0, %s65
    %s87 = sphi 0, %s89
    %s90 = sphi 0, %s87
    %s91 = sphi 0, %s90
    %s107 = sphi 0, %s91
  $region4: #{standard_gcnn_forward.1} parent=0 // loop_header_branch
    %12 = sbr.rel (%p10) target = $region8
  $region5: #{standard_gcnn_forward.1} parent=0 // loop_body
    %s14 = ssub.s32 %s9, 1
    %s15 = ssub.s32 %s9, 2
    %s16 = sadd.s32 %s9, 1
    %s18 = sadd.s32 %s17, 1
    %p21 = scmp.eq.s32.totalorder %s9, 1
    %p22 = scmp.ne.s32.totalorder %s17, %s19
    %p23 = scmp.eq.s32.totalorder %s9, 0
    %p24 = por %p22, %p23
    %p25 = scmp.ne.s32.totalorder %s17, %s19
    %p26 = scmp.eq.s32.totalorder %s14, 1
    %p27 = por %p25, %p26
    %p28 = scmp.ne.s32.totalorder %s19, %s20
    %p29 = scmp.eq.s32.totalorder %s14, 0
    %p30 = por %p28, %p29
    %p31 = scmp.ne.s32.totalorder %s19, %s20
    %p32 = scmp.eq.s32.totalorder %s15, 1
    %p33 = por %p31, %p32
    %p35 = scmp.ne.s32.totalorder %s20, %s34
    %p36 = scmp.eq.s32.totalorder %s15, 0
    %p37 = por %p35, %p36
    %s39 = sadd.s32 %s38, 1
    %p42 = scmp.eq.s32.totalorder %s9, 1
    %p43 = scmp.ne.s32.totalorder %s38, %s40
    %p44 = scmp.eq.s32.totalorder %s9, 0
    %p45 = por %p43, %p44
    %p46 = scmp.ne.s32.totalorder %s38, %s40
    %p47 = scmp.eq.s32.totalorder %s14, 1
    %p48 = por %p46, %p47
    %p49 = scmp.ne.s32.totalorder %s40, %s41
    %p50 = scmp.eq.s32.totalorder %s14, 0
    %p51 = por %p49, %p50
    %p52 = scmp.ne.s32.totalorder %s40, %s41
    %p53 = scmp.eq.s32.totalorder %s15, 1
    %p54 = por %p52, %p53
    %p56 = scmp.ne.s32.totalorder %s41, %s55
    %p57 = scmp.eq.s32.totalorder %s15, 0
    %p58 = por %p56, %p57
    %s59 = ssub.s32 %s9, %s16
    %p60 = scmp.eq.s32.totalorder %s59, 0
    %s62 = sadd.s32 %s61, 1
    %s63 = scalar_select %p60, %s61, %s62
    %p66 = pneg %p60
    %p67 = scmp.eq.s32.totalorder %s9, 1
    %p68 = por %p66, %p67
    %p69 = scmp.ne.s32.totalorder %s61, %s64
    %p70 = scmp.eq.s32.totalorder %s9, 0
    %p71 = por %p69, %p70
    %p72 = scmp.ne.s32.totalorder %s61, %s64
    %p73 = scmp.eq.s32.totalorder %s14, 1
    %p74 = por %p72, %p73
    %p75 = scmp.ne.s32.totalorder %s64, %s65
    %p76 = scmp.eq.s32.totalorder %s14, 0
    %p77 = por %p75, %p76
    %p78 = scmp.ne.s32.totalorder %s64, %s65
    %p79 = scmp.eq.s32.totalorder %s15, 1
    %p80 = por %p78, %p79
    %p82 = scmp.ne.s32.totalorder %s65, %s81
    %p83 = scmp.eq.s32.totalorder %s15, 0
    %p84 = por %p82, %p83
    %s85 = ssub.s32 %s9, %s16
    %p86 = scmp.eq.s32.totalorder %s85, 0
    %s88 = sadd.s32 %s87, 1
    %s89 = scalar_select %p86, %s87, %s88
    %p92 = pneg %p86
    %p93 = scmp.eq.s32.totalorder %s9, 1
    %p94 = por %p92, %p93
    %p95 = scmp.ne.s32.totalorder %s87, %s90
    %p96 = scmp.eq.s32.totalorder %s9, 0
    %p97 = por %p95, %p96
    %p98 = scmp.ne.s32.totalorder %s87, %s90
    %p99 = scmp.eq.s32.totalorder %s14, 1
    %p100 = por %p98, %p99
    %p101 = scmp.ne.s32.totalorder %s90, %s91
    %p102 = scmp.eq.s32.totalorder %s14, 0
    %p103 = por %p101, %p102
    %p104 = scmp.ne.s32.totalorder %s90, %s91
    %p105 = scmp.eq.s32.totalorder %s15, 1
    %p106 = por %p104, %p105
    %p108 = scmp.ne.s32.totalorder %s91, %s107
    %p109 = scmp.eq.s32.totalorder %s15, 0
    %p110 = por %p108, %p109
    %p111 = scmp.le.s32.totalorder 1, %s9
    %p112 = scmp.lt.s32.totalorder %s9, 3
    %p113 = pnand %p111, %p112
    %p114 = pneg %p113
    // Predicated region
    $region9: #{standard_gcnn_forward.1} parent=5 // pred_check
      _
    $region10: #{standard_gcnn_forward.1} parent=5 // pred_check_branch
      %116 = sbr.rel (%p113) target = $region12
    $region11: #{standard_gcnn_forward.1} parent=5 // pred_region
      %s117 = ssub.s32 %s9, 1
      // Predicated region
      $region13: #{standard_gcnn_forward.1} parent=11 // pred_check
        %p118 = pneg %p30
      $region14: #{standard_gcnn_forward.1} parent=11 // pred_check_branch
        %120 = sbr.rel (%p118) target = $region16
      $region15: #{standard_gcnn_forward.1} parent=11 // pred_region
        _
      $region16: #{standard_gcnn_forward.1} parent=11 // pred_fallthru
        _
      // Predicated region
      $region17: #{standard_gcnn_forward.1} parent=11 // pred_check
        %p121 = pneg %p51
      $region18: #{standard_gcnn_forward.1} parent=11 // pred_check_branch
        %123 = sbr.rel (%p121) target = $region20
      $region19: #{standard_gcnn_forward.1} parent=11 // pred_region
        _
      $region20: #{standard_gcnn_forward.1} parent=11 // pred_fallthru
        _
    $region12: #{standard_gcnn_forward.1} parent=5 // pred_fallthru
      _
    %p124 = scmp.lt.s32.totalorder %s9, 2
    // Predicated region
    $region21: #{standard_gcnn_forward.1} parent=5 // pred_check
      %p125 = pneg %p124
    $region22: #{standard_gcnn_forward.1} parent=5 // pred_check_branch
      %127 = sbr.rel (%p125) target = $region24
    $region23: #{standard_gcnn_forward.1} parent=5 // pred_region
      // Predicated region
      $region25: #{standard_gcnn_forward.1} parent=23 // pred_check
        %p128 = pneg %p71
      $region26: #{standard_gcnn_forward.1} parent=23 // pred_check_branch
        %130 = sbr.rel (%p128) target = $region28
      $region27: #{standard_gcnn_forward.1} parent=23 // pred_region
        %p131 = scmp.lt.s32.totalorder %s9, 1
        %s132 = scalar_select %p131, %s9, 1
        %s133 = smul.addr %s132, 2
        %s134 = smul.addr %s133, 8
        %s135 = scalar_lea.vmem %s2, %s134
      $region28: #{standard_gcnn_forward.1} parent=23 // pred_fallthru
        _
    $region24: #{standard_gcnn_forward.1} parent=5 // pred_fallthru
      _
    %p136 = scmp.le.s32.totalorder 1, %s9
    %p137 = scmp.lt.s32.totalorder %s9, 3
    %p138 = pnand %p136, %p137
    %p139 = pneg %p138
    // Predicated region
    $region29: #{standard_gcnn_forward.1} parent=5 // pred_check
      _
    $region30: #{standard_gcnn_forward.1} parent=5 // pred_check_branch
      %141 = sbr.rel (%p138) target = $region32
    $region31: #{standard_gcnn_forward.1} parent=5 // pred_region
      %s142 = ssub.s32 %s9, 1
      %p143 = pneg %p30
      %p144 = pneg %p27
      %p145 = pneg %p51
      %p146 = pneg %p48
      %p147 = scmp.lt.s32.totalorder %s14, 1
      %s148 = scalar_select %p147, %s14, 1
      %s149 = smul.addr %s148, 2
      %s150 = smul.addr %s149, 8
      %s151 = scalar_lea.vmem %s2, %s150
      %p152 = pneg %p77
      %p153 = pneg %p74
      %p154 = pneg %p103
      %p155 = pneg %p100
      %p156 = scmp.lt.s32.totalorder %s14, 1
      %s157 = scalar_select %p156, %s14, 1
      %s158 = smul.addr %s157, 2
      %s159 = smul.addr %s158, 8
      %s160 = scalar_lea.vmem %s3, %s159
      %p161 = scmp.lt.s32.totalorder %s14, 1
      %s162 = scalar_select %p161, %s14, 1
      %s163 = smul.addr %s162, 2
      %s164 = smul.addr %s163, 8
      %s165 = scalar_lea.vmem %s2, %s164
      %p166 = scmp.lt.s32.totalorder %s14, 1
      %s167 = scalar_select %p166, %s14, 1
      %s168 = smul.addr %s167, 2
      %s169 = smul.addr %s168, 8
      %s170 = scalar_lea.vmem %s3, %s169
      %v171 = vld [vmem:[%s0] sm:$0xff]
      %v172 = vld [vmem:[%s0 + $0x8] sm:$0xff]
      %v173 = vld [vmem:[%s1] sm:$0xff]
      %v174 = vld [vmem:[%s1 + $0x8] sm:$0xff]
      %v175 = vld [vmem:[%s1 + $0x10] sm:$0xff]
      %v176 = vld [vmem:[%s1 + $0x18] sm:$0xff]
      %v177 = vld [vmem:[%s1 + $0x20] sm:$0xff]
      %v178 = vld [vmem:[%s1 + $0x28] sm:$0xff]
      %v179 = vld [vmem:[%s1 + $0x30] sm:$0xff]
      %v180 = vld [vmem:[%s1 + $0x38] sm:$0xff]
      %v181 = vld [vmem:[%s1 + $0x40] sm:$0xff]
      %v182 = vld [vmem:[%s1 + $0x48] sm:$0xff]
      %v183 = vld [vmem:[%s1 + $0x50] sm:$0xff]
      %v184 = vld [vmem:[%s1 + $0x58] sm:$0xff]
      %v185 = vld [vmem:[%s1 + $0x60] sm:$0xff]
      %v186 = vld [vmem:[%s1 + $0x68] sm:$0xff]
      %v187 = vld [vmem:[%s165] sm:$0xff]
      %v188 = vld [vmem:[%s165 + $0x8] sm:$0xff]
      %vm189 = vcmask 130048
      %v191 = vsel %vm189, %v171, 0
      %v194 = vsel %vm189, %v172, 0
      %196 = vmatprep.subr.mxu0 0.0
      %197 = vmatpush1.msra.mxu0 %v187
      %198 = vmatprep.subr.mxu0 0.0
      %199 = vmatpush1.msra.mxu0 %v188
      %200 = vmatprep.subr.mxu0 0.0
      %201 = vmatpush1.msra.mxu0 0.0
      %202 = vmatprep.subr.mxu0 0.0
      %203 = vmatpush1.msra.mxu0 0.0
      %204 = vmatprep.subr.mxu0 0.0
      %205 = vmatpush1.msra.mxu0 0.0
      %206 = vmatprep.subr.mxu0 0.0
      %207 = vmatpush1.msra.mxu0 0.0
      %208 = vmatprep.subr.mxu0 0.0
      %209 = vmatpush1.msra.mxu0 0.0
      %210 = vmatprep.subr.mxu0 0.0
      %211 = vmatpush1.msra.mxu0 0.0
      %212 = vmatprep.subr.mxu0 0.0
      %213 = vmatpush1.msra.mxu0 0.0
      %214 = vmatprep.subr.mxu0 0.0
      %215 = vmatpush1.msra.mxu0 0.0
      %216 = vmatprep.subr.mxu0 0.0
      %217 = vmatpush1.msra.mxu0 0.0
      %218 = vmatprep.subr.mxu0 0.0
      %219 = vmatpush1.msra.mxu0 0.0
      %220 = vmatprep.subr.mxu0 0.0
      %221 = vmatpush1.msra.mxu0 0.0
      %222 = vmatprep.subr.mxu0 0.0
      %223 = vmatpush1.msra.mxu0 0.0
      %224 = vmatprep.subr.mxu0 0.0
      %225 = vmatpush1.msra.mxu0 0.0
      %226 = vmatprep.subr.mxu0 0.0
      %227 = vmatpush1.msra.mxu0 0.0
      %228 = vmatprep.subr.mxu0 0.0
      %229 = vmatpush1.msra.mxu0 0.0
      %230 = vmatprep.subr.mxu0 0.0
      %231 = vmatpush1.msra.mxu0 0.0
      %232 = vmatprep.subr.mxu0 0.0
      %233 = vmatpush1.msra.mxu0 0.0
      %234 = vmatprep.subr.mxu0 0.0
      %235 = vmatpush1.msra.mxu0 0.0
      %236 = vmatprep.subr.mxu0 0.0
      %237 = vmatpush1.msra.mxu0 0.0
      %238 = vmatprep.subr.mxu0 0.0
      %239 = vmatpush1.msra.mxu0 0.0
      %240 = vmatprep.subr.mxu0 0.0
      %241 = vmatpush1.msra.mxu0 0.0
      %242 = vmatprep.subr.mxu0 0.0
      %243 = vmatpush1.msra.mxu0 0.0
      %244 = vmatprep.subr.mxu0 0.0
      %245 = vmatpush1.msra.mxu0 0.0
      %246 = vmatprep.subr.mxu0 0.0
      %247 = vmatpush1.msra.mxu0 0.0
      %248 = vmatprep.subr.mxu0 0.0
      %249 = vmatpush1.msra.mxu0 0.0
      %250 = vmatprep.subr.mxu0 0.0
      %251 = vmatpush1.msra.mxu0 0.0
      %252 = vmatprep.subr.mxu0 0.0
      %253 = vmatpush1.msra.mxu0 0.0
      %254 = vmatprep.subr.mxu0 0.0
      %255 = vmatpush1.msra.mxu0 0.0
      %256 = vmatprep.subr.mxu0 0.0
      %257 = vmatpush1.msra.mxu0 0.0
      %258 = vmatprep.subr.mxu0 0.0
      %259 = vmatpush1.msra.mxu0 0.0
      %260 = vmatprep.mubr.f32.mxu0 0.0
      %261 = vmatmul.mubr.f32.gmra.mrb[0].mxu0 %v191
      %v262 = vpop.f32.mrb[0].mxu0
      %v263 = vadd.f32 0.0, %v262
      %v264 = vpop.f32.mrb[0].mxu0
      %265 = vmatprep.mubr.f32.mxu0 0.0
      %266 = vmatmul.mubr.f32.gmra.mrb[0].mxu0 %v194
      %v267 = vpop.f32.mrb[0].mxu0
      %v268 = vadd.f32 0.0, %v267
      %v269 = vpop.f32.mrb[0].mxu0
      %270 = vdwg.mxu0
      %v271 = vlaneseq
      %v272 = vshrl.u32 %v271, 7
      %v273 = vsub.s32 0, %v272
      %v274 = vrot.slane %v174, %v273
      %vm275 = vcmask 64512
      %v277 = vsel %vm275, %v263, 0
      %v280 = vsel %vm275, %v268, 0
      %282 = vmatprep.subr.mxu0 0.0
      %283 = vmatpush1.msra.mxu0 %v173
      %284 = vmatprep.subr.mxu0 0.0
      %285 = vmatpush1.msra.mxu0 0.0
      %286 = vmatprep.subr.mxu0 0.0
      %287 = vmatpush1.msra.mxu0 0.0
      %288 = vmatprep.subr.mxu0 0.0
      %289 = vmatpush1.msra.mxu0 0.0
      %290 = vmatprep.subr.mxu0 0.0
      %291 = vmatpush1.msra.mxu0 0.0
      %292 = vmatprep.subr.mxu0 0.0
      %293 = vmatpush1.msra.mxu0 0.0
      %294 = vmatprep.subr.mxu0 0.0
      %295 = vmatpush1.msra.mxu0 0.0
      %296 = vmatprep.subr.mxu0 0.0
      %297 = vmatpush1.msra.mxu0 0.0
      %298 = vmatprep.subr.mxu0 0.0
      %299 = vmatpush1.msra.mxu0 0.0
      %300 = vmatprep.subr.mxu0 0.0
      %301 = vmatpush1.msra.mxu0 0.0
      %302 = vmatprep.subr.mxu0 0.0
      %303 = vmatpush1.msra.mxu0 0.0
      %304 = vmatprep.subr.mxu0 0.0
      %305 = vmatpush1.msra.mxu0 0.0
      %306 = vmatprep.subr.mxu0 0.0
      %307 = vmatpush1.msra.mxu0 0.0
      %308 = vmatprep.subr.mxu0 0.0
      %309 = vmatpush1.msra.mxu0 0.0
      %310 = vmatprep.subr.mxu0 0.0
      %311 = vmatpush1.msra.mxu0 0.0
      %312 = vmatprep.subr.mxu0 0.0
      %313 = vmatpush1.msra.mxu0 0.0
      %314 = vmatprep.subr.mxu0 0.0
      %315 = vmatpush1.msra.mxu0 0.0
      %316 = vmatprep.subr.mxu0 0.0
      %317 = vmatpush1.msra.mxu0 0.0
      %318 = vmatprep.subr.mxu0 0.0
      %319 = vmatpush1.msra.mxu0 0.0
      %320 = vmatprep.subr.mxu0 0.0
      %321 = vmatpush1.msra.mxu0 0.0
      %322 = vmatprep.subr.mxu0 0.0
      %323 = vmatpush1.msra.mxu0 0.0
      %324 = vmatprep.subr.mxu0 0.0
      %325 = vmatpush1.msra.mxu0 0.0
      %326 = vmatprep.subr.mxu0 0.0
      %327 = vmatpush1.msra.mxu0 0.0
      %328 = vmatprep.subr.mxu0 0.0
      %329 = vmatpush1.msra.mxu0 0.0
      %330 = vmatprep.subr.mxu0 0.0
      %331 = vmatpush1.msra.mxu0 0.0
      %332 = vmatprep.subr.mxu0 0.0
      %333 = vmatpush1.msra.mxu0 0.0
      %334 = vmatprep.subr.mxu0 0.0
      %335 = vmatpush1.msra.mxu0 0.0
      %336 = vmatprep.subr.mxu0 0.0
      %337 = vmatpush1.msra.mxu0 0.0
      %338 = vmatprep.subr.mxu0 0.0
      %339 = vmatpush1.msra.mxu0 0.0
      %340 = vmatprep.subr.mxu0 0.0
      %341 = vmatpush1.msra.mxu0 0.0
      %342 = vmatprep.subr.mxu0 0.0
      %343 = vmatpush1.msra.mxu0 0.0
      %344 = vmatprep.subr.mxu0 0.0
      %345 = vmatpush1.msra.mxu0 0.0
      %346 = vmatprep.mubr.f32.mxu0 0.0
      %347 = vmatmul.mubr.f32.gmra.mrb[0].mxu0 %v277
      %v348 = vpop.f32.mrb[0].mxu0
      %v349 = vadd.f32 %v274, %v348
      %v350 = vpop.f32.mrb[0].mxu0
      %351 = vmatprep.mubr.f32.mxu0 0.0
      %352 = vmatmul.mubr.f32.gmra.mrb[0].mxu0 %v280
      %v353 = vpop.f32.mrb[0].mxu0
      %v354 = vadd.f32 %v274, %v353
      %v355 = vpop.f32.mrb[0].mxu0
      %356 = vdwg.mxu0
      %vm357 = vcmp.ge.f32.partialorder %v349, 0.0
      %vm358 = vcmp.ge.f32.partialorder %v354, 0.0
      %v359 = vmul.f32 %v349, 0.01
      %v360 = vmul.f32 %v354, 0.01
      %v361 = vsel %vm357, %v349, %v359
      %v362 = vsel %vm358, %v354, %v360
      %363 = vmatprep.subr.mxu0 0.0
      %364 = vmatpush1.msra.mxu0 %v361
      %365 = vmatprep.subr.mxu0 0.0
      %366 = vmatpush1.msra.mxu0 %v362
      %367 = vmatprep.subr.mxu0 0.0
      %368 = vmatpush1.msra.mxu0 0.0
      %369 = vmatprep.subr.mxu0 0.0
      %370 = vmatpush1.msra.mxu0 0.0
      %371 = vmatprep.subr.mxu0 0.0
      %372 = vmatpush1.msra.mxu0 0.0
      %373 = vmatprep.subr.mxu0 0.0
      %374 = vmatpush1.msra.mxu0 0.0
      %375 = vmatprep.subr.mxu0 0.0
      %376 = vmatpush1.msra.mxu0 0.0
      %377 = vmatprep.subr.mxu0 0.0
      %378 = vmatpush1.msra.mxu0 0.0
      %379 = vmatprep.subr.mxu0 0.0
      %380 = vmatpush1.msra.mxu0 0.0
      %381 = vmatprep.subr.mxu0 0.0
      %382 = vmatpush1.msra.mxu0 0.0
      %383 = vmatprep.subr.mxu0 0.0
      %384 = vmatpush1.msra.mxu0 0.0
      %385 = vmatprep.subr.mxu0 0.0
      %386 = vmatpush1.msra.mxu0 0.0
      %387 = vmatprep.subr.mxu0 0.0
      %388 = vmatpush1.msra.mxu0 0.0
      %389 = vmatprep.subr.mxu0 0.0
      %390 = vmatpush1.msra.mxu0 0.0
      %391 = vmatprep.subr.mxu0 0.0
      %392 = vmatpush1.msra.mxu0 0.0
      %393 = vmatprep.subr.mxu0 0.0
      %394 = vmatpush1.msra.mxu0 0.0
      %395 = vmatprep.subr.mxu0 0.0
      %396 = vmatpush1.msra.mxu0 0.0
      %397 = vmatprep.subr.mxu0 0.0
      %398 = vmatpush1.msra.mxu0 0.0
      %399 = vmatprep.subr.mxu0 0.0
      %400 = vmatpush1.msra.mxu0 0.0
      %401 = vmatprep.subr.mxu0 0.0
      %402 = vmatpush1.msra.mxu0 0.0
      %403 = vmatprep.subr.mxu0 0.0
      %404 = vmatpush1.msra.mxu0 0.0
      %405 = vmatprep.subr.mxu0 0.0
      %406 = vmatpush1.msra.mxu0 0.0
      %407 = vmatprep.subr.mxu0 0.0
      %408 = vmatpush1.msra.mxu0 0.0
      %409 = vmatprep.subr.mxu0 0.0
      %410 = vmatpush1.msra.mxu0 0.0
      %411 = vmatprep.subr.mxu0 0.0
      %412 = vmatpush1.msra.mxu0 0.0
      %413 = vmatprep.subr.mxu0 0.0
      %414 = vmatpush1.msra.mxu0 0.0
      %415 = vmatprep.subr.mxu0 0.0
      %416 = vmatpush1.msra.mxu0 0.0
      %417 = vmatprep.subr.mxu0 0.0
      %418 = vmatpush1.msra.mxu0 0.0
      %419 = vmatprep.subr.mxu0 0.0
      %420 = vmatpush1.msra.mxu0 0.0
      %421 = vmatprep.subr.mxu0 0.0
      %422 = vmatpush1.msra.mxu0 0.0
      %423 = vmatprep.subr.mxu0 0.0
      %424 = vmatpush1.msra.mxu0 0.0
      %425 = vmatprep.subr.mxu0 0.0
      %426 = vmatpush1.msra.mxu0 0.0
      %427 = vmatprep.mubr.f32.mxu0 0.0
      %428 = vmatmul.mubr.f32.gmra.mrb[0].mxu0 %v191
      %v429 = vpop.f32.mrb[0].mxu0
      %v430 = vadd.f32 0.0, %v429
      %v431 = vpop.f32.mrb[0].mxu0
      %432 = vmatprep.mubr.f32.mxu0 0.0
      %433 = vmatmul.mubr.f32.gmra.mrb[0].mxu0 %v194
      %v434 = vpop.f32.mrb[0].mxu0
      %v435 = vadd.f32 0.0, %v434
      %v436 = vpop.f32.mrb[0].mxu0
      %437 = vdwg.mxu0
      %v438 = vlaneseq
      %v439 = vshrl.u32 %v438, 7
      %v440 = vsub.s32 0, %v439
      %v441 = vrot.slane %v179, %v440
      %vm442 = vcmask 261120
      %v444 = vsel %vm442, %v430, 0
      %v447 = vsel %vm442, %v435, 0
      %449 = vmatprep.subr.mxu0 0.0
      %450 = vmatpush1.msra.mxu0 %v175
      %451 = vmatprep.subr.mxu0 0.0
      %452 = vmatpush1.msra.mxu0 %v176
      %453 = vmatprep.subr.mxu0 0.0
      %454 = vmatpush1.msra.mxu0 %v177
      %455 = vmatprep.subr.mxu0 0.0
      %456 = vmatpush1.msra.mxu0 %v178
      %457 = vmatprep.subr.mxu0 0.0
      %458 = vmatpush1.msra.mxu0 0.0
      %459 = vmatprep.subr.mxu0 0.0
      %460 = vmatpush1.msra.mxu0 0.0
      %461 = vmatprep.subr.mxu0 0.0
      %462 = vmatpush1.msra.mxu0 0.0
      %463 = vmatprep.subr.mxu0 0.0
      %464 = vmatpush1.msra.mxu0 0.0
      %465 = vmatprep.subr.mxu0 0.0
      %466 = vmatpush1.msra.mxu0 0.0
      %467 = vmatprep.subr.mxu0 0.0
      %468 = vmatpush1.msra.mxu0 0.0
      %469 = vmatprep.subr.mxu0 0.0
      %470 = vmatpush1.msra.mxu0 0.0
      %471 = vmatprep.subr.mxu0 0.0
      %472 = vmatpush1.msra.mxu0 0.0
      %473 = vmatprep.subr.mxu0 0.0
      %474 = vmatpush1.msra.mxu0 0.0
      %475 = vmatprep.subr.mxu0 0.0
      %476 = vmatpush1.msra.mxu0 0.0
      %477 = vmatprep.subr.mxu0 0.0
      %478 = vmatpush1.msra.mxu0 0.0
      %479 = vmatprep.subr.mxu0 0.0
      %480 = vmatpush1.msra.mxu0 0.0
      %481 = vmatprep.subr.mxu0 0.0
      %482 = vmatpush1.msra.mxu0 0.0
      %483 = vmatprep.subr.mxu0 0.0
      %484 = vmatpush1.msra.mxu0 0.0
      %485 = vmatprep.subr.mxu0 0.0
      %486 = vmatpush1.msra.mxu0 0.0
      %487 = vmatprep.subr.mxu0 0.0
      %488 = vmatpush1.msra.mxu0 0.0
      %489 = vmatprep.subr.mxu0 0.0
      %490 = vmatpush1.msra.mxu0 0.0
      %491 = vmatprep.subr.mxu0 0.0
      %492 = vmatpush1.msra.mxu0 0.0
      %493 = vmatprep.subr.mxu0 0.0
      %494 = vmatpush1.msra.mxu0 0.0
      %495 = vmatprep.subr.mxu0 0.0
      %496 = vmatpush1.msra.mxu0 0.0
      %497 = vmatprep.subr.mxu0 0.0
      %498 = vmatpush1.msra.mxu0 0.0
      %499 = vmatprep.subr.mxu0 0.0
      %500 = vmatpush1.msra.mxu0 0.0
      %501 = vmatprep.subr.mxu0 0.0
      %502 = vmatpush1.msra.mxu0 0.0
      %503 = vmatprep.subr.mxu0 0.0
      %504 = vmatpush1.msra.mxu0 0.0
      %505 = vmatprep.subr.mxu0 0.0
      %506 = vmatpush1.msra.mxu0 0.0
      %507 = vmatprep.subr.mxu0 0.0
      %508 = vmatpush1.msra.mxu0 0.0
      %509 = vmatprep.subr.mxu0 0.0
      %510 = vmatpush1.msra.mxu0 0.0
      %511 = vmatprep.subr.mxu0 0.0
      %512 = vmatpush1.msra.mxu0 0.0
      %513 = vmatprep.mubr.f32.mxu0 0.0
      %514 = vmatmul.mubr.f32.gmra.mrb[0].mxu0 %v444
      %v515 = vpop.f32.mrb[0].mxu0
      %v516 = vadd.f32 %v441, %v515
      %v517 = vpop.f32.mrb[0].mxu0
      %518 = vmatprep.mubr.f32.mxu0 0.0
      %519 = vmatmul.mubr.f32.gmra.mrb[0].mxu0 %v447
      %v520 = vpop.f32.mrb[0].mxu0
      %v521 = vadd.f32 %v441, %v520
      %v522 = vpop.f32.mrb[0].mxu0
      %523 = vdwg.mxu0
      %vm524 = vcmp.ge.f32.partialorder %v516, 0.0
      %vm525 = vcmp.ge.f32.partialorder %v521, 0.0
      %v526 = vmul.f32 %v516, 0.01
      %v527 = vmul.f32 %v521, 0.01
      %v528 = vsel %vm524, %v516, %v526
      %v529 = vsel %vm525, %v521, %v527
      %v531 = vsel %vm442, %v528, 0
      %v534 = vsel %vm442, %v529, 0
      %536 = vmatprep.subr.mxu0 0.0
      %537 = vmatpush1.msra.mxu0 %v180
      %538 = vmatprep.subr.mxu0 0.0
      %539 = vmatpush1.msra.mxu0 %v181
      %540 = vmatprep.subr.mxu0 0.0
      %541 = vmatpush1.msra.mxu0 %v182
      %542 = vmatprep.subr.mxu0 0.0
      %543 = vmatpush1.msra.mxu0 %v183
      %544 = vmatprep.subr.mxu0 0.0
      %545 = vmatpush1.msra.mxu0 0.0
      %546 = vmatprep.subr.mxu0 0.0
      %547 = vmatpush1.msra.mxu0 0.0
      %548 = vmatprep.subr.mxu0 0.0
      %549 = vmatpush1.msra.mxu0 0.0
      %550 = vmatprep.subr.mxu0 0.0
      %551 = vmatpush1.msra.mxu0 0.0
      %552 = vmatprep.subr.mxu0 0.0
      %553 = vmatpush1.msra.mxu0 0.0
      %554 = vmatprep.subr.mxu0 0.0
      %555 = vmatpush1.msra.mxu0 0.0
      %556 = vmatprep.subr.mxu0 0.0
      %557 = vmatpush1.msra.mxu0 0.0
      %558 = vmatprep.subr.mxu0 0.0
      %559 = vmatpush1.msra.mxu0 0.0
      %560 = vmatprep.subr.mxu0 0.0
      %561 = vmatpush1.msra.mxu0 0.0
      %562 = vmatprep.subr.mxu0 0.0
      %563 = vmatpush1.msra.mxu0 0.0
      %564 = vmatprep.subr.mxu0 0.0
      %565 = vmatpush1.msra.mxu0 0.0
      %566 = vmatprep.subr.mxu0 0.0
      %567 = vmatpush1.msra.mxu0 0.0
      %568 = vmatprep.subr.mxu0 0.0
      %569 = vmatpush1.msra.mxu0 0.0
      %570 = vmatprep.subr.mxu0 0.0
      %571 = vmatpush1.msra.mxu0 0.0
      %572 = vmatprep.subr.mxu0 0.0
      %573 = vmatpush1.msra.mxu0 0.0
      %574 = vmatprep.subr.mxu0 0.0
      %575 = vmatpush1.msra.mxu0 0.0
      %576 = vmatprep.subr.mxu0 0.0
      %577 = vmatpush1.msra.mxu0 0.0
      %578 = vmatprep.subr.mxu0 0.0
      %579 = vmatpush1.msra.mxu0 0.0
      %580 = vmatprep.subr.mxu0 0.0
      %581 = vmatpush1.msra.mxu0 0.0
      %582 = vmatprep.subr.mxu0 0.0
      %583 = vmatpush1.msra.mxu0 0.0
      %584 = vmatprep.subr.mxu0 0.0
      %585 = vmatpush1.msra.mxu0 0.0
      %586 = vmatprep.subr.mxu0 0.0
      %587 = vmatpush1.msra.mxu0 0.0
      %588 = vmatprep.subr.mxu0 0.0
      %589 = vmatpush1.msra.mxu0 0.0
      %590 = vmatprep.subr.mxu0 0.0
      %591 = vmatpush1.msra.mxu0 0.0
      %592 = vmatprep.subr.mxu0 0.0
      %593 = vmatpush1.msra.mxu0 0.0
      %594 = vmatprep.subr.mxu0 0.0
      %595 = vmatpush1.msra.mxu0 0.0
      %596 = vmatprep.subr.mxu0 0.0
      %597 = vmatpush1.msra.mxu0 0.0
      %598 = vmatprep.subr.mxu0 0.0
      %599 = vmatpush1.msra.mxu0 0.0
      %600 = vmatprep.mubr.f32.mxu0 0.0
      %601 = vmatmul.mubr.f32.gmra.mrb[0].mxu0 %v531
      %v602 = vpop.f32.mrb[0].mxu0
      %v603 = vadd.f32 0.0, %v602
      %v604 = vpop.f32.mrb[0].mxu0
      %605 = vmatprep.mubr.f32.mxu0 0.0
      %606 = vmatmul.mubr.f32.gmra.mrb[0].mxu0 %v534
      %v607 = vpop.f32.mrb[0].mxu0
      %v608 = vadd.f32 0.0, %v607
      %v609 = vpop.f32.mrb[0].mxu0
      %610 = vdwg.mxu0
      %v611 = vlaneseq
      %v612 = vshrl.u32 %v611, 7
      %v613 = vsub.s32 0, %v612
      %v614 = vrot.slane %v184, %v613
      %615 = vmatprep.subr.mxu0 0.0
      %616 = vmatpush1.msra.mxu0 %v603
      %617 = vmatprep.subr.mxu0 0.0
      %618 = vmatpush1.msra.mxu0 %v608
      %619 = vmatprep.subr.mxu0 0.0
      %620 = vmatpush1.msra.mxu0 0.0
      %621 = vmatprep.subr.mxu0 0.0
      %622 = vmatpush1.msra.mxu0 0.0
      %623 = vmatprep.subr.mxu0 0.0
      %624 = vmatpush1.msra.mxu0 0.0
      %625 = vmatprep.subr.mxu0 0.0
      %626 = vmatpush1.msra.mxu0 0.0
      %627 = vmatprep.subr.mxu0 0.0
      %628 = vmatpush1.msra.mxu0 0.0
      %629 = vmatprep.subr.mxu0 0.0
      %630 = vmatpush1.msra.mxu0 0.0
      %631 = vmatprep.subr.mxu0 0.0
      %632 = vmatpush1.msra.mxu0 0.0
      %633 = vmatprep.subr.mxu0 0.0
      %634 = vmatpush1.msra.mxu0 0.0
      %635 = vmatprep.subr.mxu0 0.0
      %636 = vmatpush1.msra.mxu0 0.0
      %637 = vmatprep.subr.mxu0 0.0
      %638 = vmatpush1.msra.mxu0 0.0
      %639 = vmatprep.subr.mxu0 0.0
      %640 = vmatpush1.msra.mxu0 0.0
      %641 = vmatprep.subr.mxu0 0.0
      %642 = vmatpush1.msra.mxu0 0.0
      %643 = vmatprep.subr.mxu0 0.0
      %644 = vmatpush1.msra.mxu0 0.0
      %645 = vmatprep.subr.mxu0 0.0
      %646 = vmatpush1.msra.mxu0 0.0
      %647 = vmatprep.subr.mxu0 0.0
      %648 = vmatpush1.msra.mxu0 0.0
      %649 = vmatprep.subr.mxu0 0.0
      %650 = vmatpush1.msra.mxu0 0.0
      %651 = vmatprep.subr.mxu0 0.0
      %652 = vmatpush1.msra.mxu0 0.0
      %653 = vmatprep.subr.mxu0 0.0
      %654 = vmatpush1.msra.mxu0 0.0
      %655 = vmatprep.subr.mxu0 0.0
      %656 = vmatpush1.msra.mxu0 0.0
      %657 = vmatprep.subr.mxu0 0.0
      %658 = vmatpush1.msra.mxu0 0.0
      %659 = vmatprep.subr.mxu0 0.0
      %660 = vmatpush1.msra.mxu0 0.0
      %661 = vmatprep.subr.mxu0 0.0
      %662 = vmatpush1.msra.mxu0 0.0
      %663 = vmatprep.subr.mxu0 0.0
      %664 = vmatpush1.msra.mxu0 0.0
      %665 = vmatprep.subr.mxu0 0.0
      %666 = vmatpush1.msra.mxu0 0.0
      %667 = vmatprep.subr.mxu0 0.0
      %668 = vmatpush1.msra.mxu0 0.0
      %669 = vmatprep.subr.mxu0 0.0
      %670 = vmatpush1.msra.mxu0 0.0
      %671 = vmatprep.subr.mxu0 0.0
      %672 = vmatpush1.msra.mxu0 0.0
      %673 = vmatprep.subr.mxu0 0.0
      %674 = vmatpush1.msra.mxu0 0.0
      %675 = vmatprep.subr.mxu0 0.0
      %676 = vmatpush1.msra.mxu0 0.0
      %677 = vmatprep.subr.mxu0 0.0
      %678 = vmatpush1.msra.mxu0 0.0
      %679 = vmatprep.mubr.f32.mxu0 0.0
      %680 = vmatmul.mubr.f32.gmra.mrb[0].mxu0 %v191
      %v681 = vpop.f32.mrb[0].mxu0
      %v682 = vadd.f32 %v614, %v681
      %v683 = vpop.f32.mrb[0].mxu0
      %684 = vmatprep.mubr.f32.mxu0 0.0
      %685 = vmatmul.mubr.f32.gmra.mrb[0].mxu0 %v194
      %v686 = vpop.f32.mrb[0].mxu0
      %v687 = vadd.f32 %v614, %v686
      %v688 = vpop.f32.mrb[0].mxu0
      %689 = vdwg.mxu0
      %v690 = vlaneseq
      %v691 = vshrl.u32 %v690, 7
      %v692 = vsub.s32 0, %v691
      %v693 = vrot.slane %v186, %v692
      %v695 = vsel %vm275, %v682, 0
      %v698 = vsel %vm275, %v687, 0
      %700 = vmatprep.subr.mxu0 0.0
      %701 = vmatpush1.msra.mxu0 %v185
      %702 = vmatprep.subr.mxu0 0.0
      %703 = vmatpush1.msra.mxu0 0.0
      %704 = vmatprep.subr.mxu0 0.0
      %705 = vmatpush1.msra.mxu0 0.0
      %706 = vmatprep.subr.mxu0 0.0
      %707 = vmatpush1.msra.mxu0 0.0
      %708 = vmatprep.subr.mxu0 0.0
      %709 = vmatpush1.msra.mxu0 0.0
      %710 = vmatprep.subr.mxu0 0.0
      %711 = vmatpush1.msra.mxu0 0.0
      %712 = vmatprep.subr.mxu0 0.0
      %713 = vmatpush1.msra.mxu0 0.0
      %714 = vmatprep.subr.mxu0 0.0
      %715 = vmatpush1.msra.mxu0 0.0
      %716 = vmatprep.subr.mxu0 0.0
      %717 = vmatpush1.msra.mxu0 0.0
      %718 = vmatprep.subr.mxu0 0.0
      %719 = vmatpush1.msra.mxu0 0.0
      %720 = vmatprep.subr.mxu0 0.0
      %721 = vmatpush1.msra.mxu0 0.0
      %722 = vmatprep.subr.mxu0 0.0
      %723 = vmatpush1.msra.mxu0 0.0
      %724 = vmatprep.subr.mxu0 0.0
      %725 = vmatpush1.msra.mxu0 0.0
      %726 = vmatprep.subr.mxu0 0.0
      %727 = vmatpush1.msra.mxu0 0.0
      %728 = vmatprep.subr.mxu0 0.0
      %729 = vmatpush1.msra.mxu0 0.0
      %730 = vmatprep.subr.mxu0 0.0
      %731 = vmatpush1.msra.mxu0 0.0
      %732 = vmatprep.subr.mxu0 0.0
      %733 = vmatpush1.msra.mxu0 0.0
      %734 = vmatprep.subr.mxu0 0.0
      %735 = vmatpush1.msra.mxu0 0.0
      %736 = vmatprep.subr.mxu0 0.0
      %737 = vmatpush1.msra.mxu0 0.0
      %738 = vmatprep.subr.mxu0 0.0
      %739 = vmatpush1.msra.mxu0 0.0
      %740 = vmatprep.subr.mxu0 0.0
      %741 = vmatpush1.msra.mxu0 0.0
      %742 = vmatprep.subr.mxu0 0.0
      %743 = vmatpush1.msra.mxu0 0.0
      %744 = vmatprep.subr.mxu0 0.0
      %745 = vmatpush1.msra.mxu0 0.0
      %746 = vmatprep.subr.mxu0 0.0
      %747 = vmatpush1.msra.mxu0 0.0
      %748 = vmatprep.subr.mxu0 0.0
      %749 = vmatpush1.msra.mxu0 0.0
      %750 = vmatprep.subr.mxu0 0.0
      %751 = vmatpush1.msra.mxu0 0.0
      %752 = vmatprep.subr.mxu0 0.0
      %753 = vmatpush1.msra.mxu0 0.0
      %754 = vmatprep.subr.mxu0 0.0
      %755 = vmatpush1.msra.mxu0 0.0
      %756 = vmatprep.subr.mxu0 0.0
      %757 = vmatpush1.msra.mxu0 0.0
      %758 = vmatprep.subr.mxu0 0.0
      %759 = vmatpush1.msra.mxu0 0.0
      %760 = vmatprep.subr.mxu0 0.0
      %761 = vmatpush1.msra.mxu0 0.0
      %762 = vmatprep.subr.mxu0 0.0
      %763 = vmatpush1.msra.mxu0 0.0
      %764 = vmatprep.mubr.f32.mxu0 0.0
      %765 = vmatmul.mubr.f32.gmra.mrb[0].mxu0 %v695
      %v766 = vpop.f32.mrb[0].mxu0
      %v767 = vadd.f32 %v693, %v766
      %v768 = vpop.f32.mrb[0].mxu0
      %769 = vmatprep.mubr.f32.mxu0 0.0
      %770 = vmatmul.mubr.f32.gmra.mrb[0].mxu0 %v698
      %v771 = vpop.f32.mrb[0].mxu0
      %v772 = vadd.f32 %v693, %v771
      %v773 = vpop.f32.mrb[0].mxu0
      %774 = vdwg.mxu0
      %v775 = vxor.u32 %v767, 2147483648
      %v776 = vxor.u32 %v772, 2147483648
      %v777 = vmul.f32 %v775, 1.442695
      %v778 = vpow.pop %v777
      %v779 = vmul.f32 %v776, 1.442695
      %v780 = vpow.pop %v779
      %v781 = vadd.f32 %v778, 1.0
      %v782 = vadd.f32 %v780, 1.0
      %v783 = vrcp.pop %v781
      %v784 = vmul.f32 1.0, %v783
      %v785 = vrcp.pop %v782
      %v786 = vmul.f32 1.0, %v785
      %789 = vrot.lane.b32.xlu0 %v767, 8
      %v790 = vpop.permute.xlu0 %789
      %791 = vrot.lane.b32.xlu0 %v772, 8
      %v792 = vpop.permute.xlu0 %791
      %797 = vrot.lane.b32.xlu0 %v784, 12
      %v798 = vpop.permute.xlu0 %797
      %799 = vrot.lane.b32.xlu0 %v786, 12
      %v800 = vpop.permute.xlu0 %799
      %v803 = vsel %vm275, %v682, %v790
      %v804 = vsel %vm275, %v687, %v792
      %vm805 = vcmask 97280
      %v806 = vsel %vm805, %v803, %v798
      %v807 = vsel %vm805, %v804, %v800
      %v808 = vsel %vm189, %v806, 0.0
      %v809 = vsel %vm189, %v807, 0.0
      %810 = vst [vmem:[%s170] sm:$0xff] %v808
      %811 = vst [vmem:[%s170 + $0x8] sm:$0xff] %v809
      %p812 = scmp.lt.s32.totalorder %s14, 1
      %s813 = scalar_select %p812, %s14, 1
      %s814 = smul.addr %s813, 2
      %s815 = smul.addr %s814, 8
      %s816 = scalar_lea.vmem %s3, %s815
      // Predicated region
      $region33: #{standard_gcnn_forward.1} parent=31 // pred_check
        %p817 = pneg %p100
      $region34: #{standard_gcnn_forward.1} parent=31 // pred_check_branch
        %819 = sbr.rel (%p817) target = $region36
      $region35: #{standard_gcnn_forward.1} parent=31 // pred_region
        _
      $region36: #{standard_gcnn_forward.1} parent=31 // pred_fallthru
        _
    $region32: #{standard_gcnn_forward.1} parent=5 // pred_fallthru
      _
    %p820 = scmp.le.s32.totalorder 2, %s9
    // Predicated region
    $region37: #{standard_gcnn_forward.1} parent=5 // pred_check
      %p821 = pneg %p820
    $region38: #{standard_gcnn_forward.1} parent=5 // pred_check_branch
      %823 = sbr.rel (%p821) target = $region40
    $region39: #{standard_gcnn_forward.1} parent=5 // pred_region
      %s824 = ssub.s32 %s9, 2
      // Predicated region
      $region41: #{standard_gcnn_forward.1} parent=39 // pred_check
        %p825 = pneg %p106
      $region42: #{standard_gcnn_forward.1} parent=39 // pred_check_branch
        %827 = sbr.rel (%p825) target = $region44
      $region43: #{standard_gcnn_forward.1} parent=39 // pred_region
        %p828 = scmp.lt.s32.totalorder %s15, 1
        %s829 = scalar_select %p828, %s15, 1
        %s830 = smul.addr %s829, 2
        %s831 = smul.addr %s830, 8
        %s832 = scalar_lea.vmem %s3, %s831
      $region44: #{standard_gcnn_forward.1} parent=39 // pred_fallthru
        _
    $region40: #{standard_gcnn_forward.1} parent=5 // pred_fallthru
      _
  $region6: #{standard_gcnn_forward.1} parent=0 // loop_footer
    %s13 = sadd.s32 1, %s9
  $region7: #{standard_gcnn_forward.1} parent=0 // loop_footer_branch
    %8 = sbr.rel target = $region3
  $region8: #{standard_gcnn_forward.1} parent=0 // loop_exit
    _

</llo_original>
